<compile_context>
chip_gen: v5e
topology: v5e:2x2
jax: 0.10.0
libtpu: 0.0.40
codegen_flags: <defaults>
</compile_context>

<pallas_src>
import functools

import jax
import jax.numpy as jnp
from jax.experimental import pallas as pl
from jax.experimental.pallas import tpu as pltpu


def _focal_kernel(logit_ref, tgt_ref, alpha_ref, out_ref, acc_ref,
                  *, hw, gamma, smooth):
    j = pl.program_id(1)

    @pl.when(j == 0)
    def _():
        acc_ref[...] = jnp.zeros_like(acc_ref)

    logit = logit_ref[...].astype(jnp.float32)      # (1, C, T)  "probabilities"
    tgt = tgt_ref[...]                              # (1, 1, T)  int32 class ids
    alpha = alpha_ref[...].astype(jnp.float32)      # (1, C, 1)  per-class alpha

    _, num_class, t = logit.shape

    cls = jax.lax.broadcasted_iota(jnp.int32, (1, num_class, t), 1)
    hit = cls == tgt                                # (1, C, T) one-hot mask

    # torch.clamp(one_hot, smooth/(C-1), 1-smooth):
    #   hit  -> 1 - smooth ; miss -> smooth / (C-1)
    lo = smooth / (num_class - 1)
    hi = 1.0 - smooth
    one_hot = jnp.where(hit, hi, lo)

    # One pass over the (C, T) tile: pt numerator + per-sample alpha gather,
    # both reduced over the (small) class/sublane axis.
    pt = jnp.sum(one_hot * logit, axis=1) + smooth            # (1, T)
    alpha_s = jnp.sum(jnp.where(hit, alpha, 0.0), axis=1)     # (1, T)

    # Lane-mask the padded tail of the last sample tile (only emitted if needed).
    if hw % t != 0:
        lane = jax.lax.broadcasted_iota(jnp.int32, (1, t), 1)
        valid = (j * t + lane) < hw
        pt = jnp.where(valid, pt, 1.0)        # -> (1-pt)^g * log(pt) == 0
        alpha_s = jnp.where(valid, alpha_s, 0.0)

    logpt = jnp.log(pt)
    one_minus = 1.0 - pt
    g = float(gamma)
    if g == int(g) and 0.0 <= g <= 4.0:
        w = jnp.ones_like(one_minus)
        for _ in range(int(g)):               # gamma=2 -> (1-pt)*(1-pt), VPU only
            w = w * one_minus
    else:
        w = jnp.power(one_minus, g)

    # Lane-dense per-sample accumulation (VPU adds, free under the mem roofline).
    acc_ref[...] += -alpha_s * w * logpt

    @pl.when(j == pl.num_programs(1) - 1)
    def _():
        s = jnp.sum(acc_ref[...], axis=1, keepdims=True)   # one XLU reduce / batch
        out_ref[...] = s[None, :, :]                       # (1, 1, 1) batch partial


def focal_loss(logit_nchw, target, *, alpha=None, gamma=2.0, smooth=1e-5,
               balance_index=0, size_average=True, tile_samples=None):
    """Pallas FocalLoss forward. apply_nonlin is assumed None (inputs are probs)."""
    # TODO(synk): apply_nonlin (an arbitrary caller-supplied callable) is not
    # translated; inputs are treated as probabilities, matching apply_nonlin=None.
    N, C, H, W = logit_nchw.shape
    HW = H * W
    M = N * HW

    # Free reshapes only — no transpose, no dtype cast in HBM.  The kernel reads
    # the original NCHW bytes and casts per-tile inside VMEM.
    logit3d = logit_nchw.reshape(N, C, HW)
    tgt3d = target.reshape(N, 1, HW).astype(jnp.int32)

    if alpha is None:
        alpha_arr = jnp.ones((1, C, 1), jnp.float32)
    elif isinstance(alpha, (list, tuple)):
        a = jnp.asarray(alpha, jnp.float32)
        alpha_arr = (a / a.sum()).reshape(1, C, 1)
    elif isinstance(alpha, float):
        a = jnp.full((C,), 1.0 - alpha, jnp.float32).at[balance_index].set(alpha)
        alpha_arr = a.reshape(1, C, 1)
    else:
        raise TypeError("Not support alpha type")

    # Sample-axis tile: large and lane-dense (~2 MiB of f32 logits per block, so
    # double-buffered inputs stay far under the scoped VMEM limit on v5e/v6e/v7x).
    # Must be a multiple of 128 lanes unless it covers the whole H*W extent.
    if tile_samples is None:
        tile_samples = max(128, min(8192, ((2 * 1024 * 1024) // (C * 4)) // 128 * 128))
    if HW <= tile_samples:
        T = HW
    else:
        T = max(128, (tile_samples // 128) * 128)

    grid = (N, pl.cdiv(HW, T))

    kernel = functools.partial(_focal_kernel, hw=HW, gamma=float(gamma),
                               smooth=float(smooth))

    partials = pl.pallas_call(
        kernel,
        out_shape=jax.ShapeDtypeStruct((N, 1, 1), jnp.float32),
        grid_spec=pltpu.PrefetchScalarGridSpec(
            num_scalar_prefetch=0,
            grid=grid,
            in_specs=[
                pl.BlockSpec((1, C, T), lambda i, j: (i, 0, j)),   # logits tile
                pl.BlockSpec((1, 1, T), lambda i, j: (i, 0, j)),   # targets tile
                pl.BlockSpec((1, C, 1), lambda i, j: (0, 0, 0)),   # alpha (resident)
            ],
            out_specs=pl.BlockSpec((1, 1, 1), lambda i, j: (i, 0, 0)),
            scratch_shapes=[pltpu.VMEM((1, T), jnp.float32)],
        ),
        compiler_params=pltpu.CompilerParams(
            # batch axis parallel (megacore split on v7x), sample-tile axis carried
            dimension_semantics=("parallel", "arbitrary"),
        ),
    )(logit3d, tgt3d, alpha_arr)

    total = jnp.sum(partials)          # tiny (N,) reduction of per-batch partials
    if size_average:
        total = total / float(M)
    return total


if __name__ == "__main__":
    key = jax.random.PRNGKey(0)
    k1, k2 = jax.random.split(key)

    N, C, H, W = 2, 4, 16, 16
    # Module is used with probabilities (apply_nonlin=None), so feed softmaxed
    # values to keep log(pt) well-defined, matching intended usage.
    raw = jax.random.normal(k1, (N, C, H, W), jnp.float32)
    probs = jax.nn.softmax(raw, axis=1)
    target = jax.random.randint(k2, (N, 1, H, W), 0, C, jnp.int32)

    loss = focal_loss(probs, target, gamma=2.0, smooth=1e-5, size_average=True)
    jax.block_until_ready(loss)

    # quick sanity vs. pure-JAX reference of the same math
    logit2d = jnp.transpose(probs, (0, 2, 3, 1)).reshape(-1, C)
    tgt = target.reshape(-1)
    one_hot = jnp.clip(jax.nn.one_hot(tgt, C), 1e-5 / (C - 1), 1.0 - 1e-5)
    pt = (one_hot * logit2d).sum(1) + 1e-5
    ref = jnp.mean(-1.0 * jnp.power(1.0 - pt, 2.0) * jnp.log(pt))
    assert jnp.allclose(loss, ref, rtol=1e-5, atol=1e-6), (loss, ref)

    print("KERNEL_OK")
</pallas_src>

<mosaic_0001>
module attributes {stable_mosaic.version = 11 : i64} {
  func.func @_focal_kernel(%arg0: i32, %arg1: i32, %arg2: memref<1x4x256xf32, #tpu.memory_space<vmem>>, %arg3: memref<1x1x256xi32, #tpu.memory_space<vmem>>, %arg4: memref<1x4x1xf32, #tpu.memory_space<vmem>>, %arg5: memref<1x1x1xf32, #tpu.memory_space<vmem>>, %arg6: memref<1x256xf32, #tpu.memory_space<vmem>>) attributes {dimension_semantics = [#tpu.dimension_semantics<parallel>, #tpu.dimension_semantics<arbitrary>], iteration_bounds = array<i64: 2, 1>, scalar_prefetch = 0 : i64, scratch_operands = 1 : i64, tpu.core_type = #tpu.core_type<tc>, window_params = [{transform_indices = @transform_0, window_bounds = array<i64: 1, 4, 256>}, {transform_indices = @transform_1, window_bounds = array<i64: 1, 1, 256>}, {pipeline_mode = #tpu.pipeline_mode<synchronous>, transform_indices = @transform_2, window_bounds = array<i64: 1, 4, 1>}, {transform_indices = @transform_3, window_bounds = array<i64: 1, 1, 1>}]} {
    %c0_i32 = arith.constant 0 : i32
    %0 = arith.cmpi eq, %arg1, %c0_i32 : i32
    %1 = arith.extui %0 : i1 to i32
    %c0_i32_0 = arith.constant 0 : i32
    %2 = arith.cmpi ne, %1, %c0_i32_0 : i32
    scf.if %2 {
      %cst_23 = arith.constant 0.000000e+00 : f32
      %37 = vector.broadcast %cst_23 : f32 to vector<1x256xf32>
      %c0_24 = arith.constant 0 : index
      %c0_25 = arith.constant 0 : index
      %38 = vector.load %arg6[%c0_24, %c0_25] : memref<1x256xf32, #tpu.memory_space<vmem>>, vector<1x256xf32>
      tpu.vector_store %arg6[%c0_24, %c0_25], %37 {strides = array<i32>} : memref<1x256xf32, #tpu.memory_space<vmem>>, vector<1x256xf32>,
    } else {
    }
    %c0 = arith.constant 0 : index
    %c0_1 = arith.constant 0 : index
    %c0_2 = arith.constant 0 : index
    %3 = vector.load %arg2[%c0, %c0_1, %c0_2] : memref<1x4x256xf32, #tpu.memory_space<vmem>>, vector<1x4x256xf32>
    %c0_3 = arith.constant 0 : index
    %c0_4 = arith.constant 0 : index
    %c0_5 = arith.constant 0 : index
    %4 = vector.load %arg3[%c0_3, %c0_4, %c0_5] : memref<1x1x256xi32, #tpu.memory_space<vmem>>, vector<1x1x256xi32>
    %c0_6 = arith.constant 0 : index
    %c0_7 = arith.constant 0 : index
    %c0_8 = arith.constant 0 : index
    %5 = vector.load %arg4[%c0_6, %c0_7, %c0_8] : memref<1x4x1xf32, #tpu.memory_space<vmem>>, vector<1x4x1xf32>
    %6 = tpu.iota {dimensions = array<i32: 1>} : vector<1x4x256xi32>
    %7 = vector.broadcast %4 : vector<1x1x256xi32> to vector<1x4x256xi32>
    %8 = arith.cmpi eq, %6, %7 : vector<1x4x256xi32>
    %cst = arith.constant 0.999989986 : f32
    %cst_9 = arith.constant 3.33333332E-6 : f32
    %9 = vector.broadcast %cst : f32 to vector<1x4x256xf32>
    %10 = vector.broadcast %cst_9 : f32 to vector<1x4x256xf32>
    %11 = arith.select %8, %9, %10 : vector<1x4x256xi1>, vector<1x4x256xf32>
    %12 = arith.mulf %11, %3 : vector<1x4x256xf32>
    %cst_10 = arith.constant dense<0.000000e+00> : vector<1x256xf32>
    %13 = vector.multi_reduction <add>, %12, %cst_10 [1] : vector<1x4x256xf32> to vector<1x256xf32>
    %cst_11 = arith.constant 9.99999974E-6 : f32
    %14 = vector.broadcast %cst_11 : f32 to vector<1x256xf32>
    %15 = arith.addf %13, %14 : vector<1x256xf32>
    %cst_12 = arith.constant 0.000000e+00 : f32
    %16 = vector.shape_cast %5 : vector<1x4x1xf32> to vector<1x4x1xf32>
    %17 = vector.broadcast %16 : vector<1x4x1xf32> to vector<1x4x256xf32>
    %18 = vector.broadcast %cst_12 : f32 to vector<1x4x256xf32>
    %19 = arith.select %8, %17, %18 : vector<1x4x256xi1>, vector<1x4x256xf32>
    %cst_13 = arith.constant dense<0.000000e+00> : vector<1x256xf32>
    %20 = vector.multi_reduction <add>, %19, %cst_13 [1] : vector<1x4x256xf32> to vector<1x256xf32>
    %21 = math.log %15 : vector<1x256xf32>
    %cst_14 = arith.constant 1.000000e+00 : f32
    %22 = vector.broadcast %cst_14 : f32 to vector<1x256xf32>
    %23 = arith.subf %22, %15 : vector<1x256xf32>
    %cst_15 = arith.constant 1.000000e+00 : f32
    %24 = vector.broadcast %cst_15 : f32 to vector<1x256xf32>
    %25 = arith.mulf %24, %23 : vector<1x256xf32>
    %26 = arith.mulf %25, %23 : vector<1x256xf32>
    %c0_16 = arith.constant 0 : index
    %c0_17 = arith.constant 0 : index
    %27 = vector.load %arg6[%c0_16, %c0_17] : memref<1x256xf32, #tpu.memory_space<vmem>>, vector<1x256xf32>
    %cst_18 = arith.constant 0.000000e+00 : f32
    %28 = vector.broadcast %cst_18 : f32 to vector<1x256xf32>
    %29 = arith.subf %28, %20 : vector<1x256xf32>
    %30 = arith.mulf %29, %26 : vector<1x256xf32>
    %31 = arith.mulf %30, %21 : vector<1x256xf32>
    %32 = arith.addf %27, %31 : vector<1x256xf32>
    %c0_19 = arith.constant 0 : index
    %c0_20 = arith.constant 0 : index
    %33 = vector.load %arg6[%c0_19, %c0_20] : memref<1x256xf32, #tpu.memory_space<vmem>>, vector<1x256xf32>
    tpu.vector_store %arg6[%c0_19, %c0_20], %32 {strides = array<i32>} : memref<1x256xf32, #tpu.memory_space<vmem>>, vector<1x256xf32>,
    %c0_i32_21 = arith.constant 0 : i32
    %34 = arith.cmpi eq, %arg1, %c0_i32_21 : i32
    %35 = arith.extui %34 : i1 to i32
    %c0_i32_22 = arith.constant 0 : i32
    %36 = arith.cmpi ne, %35, %c0_i32_22 : i32
    scf.if %36 {
      %c0_23 = arith.constant 0 : index
      %c0_24 = arith.constant 0 : index
      %37 = vector.load %arg6[%c0_23, %c0_24] : memref<1x256xf32, #tpu.memory_space<vmem>>, vector<1x256xf32>
      %cst_25 = arith.constant dense<0.000000e+00> : vector<1xf32>
      %38 = vector.multi_reduction <add>, %37, %cst_25 [1] : vector<1x256xf32> to vector<1xf32>
      %39 = vector.shape_cast %38 : vector<1xf32> to vector<1x1xf32>
      %40 = vector.shape_cast %39 : vector<1x1xf32> to vector<1x1x1xf32>
      %c0_26 = arith.constant 0 : index
      %c0_27 = arith.constant 0 : index
      %c0_28 = arith.constant 0 : index
      %41 = vector.load %arg5[%c0_26, %c0_27, %c0_28] : memref<1x1x1xf32, #tpu.memory_space<vmem>>, vector<1x1x1xf32>
      tpu.vector_store %arg5[%c0_26, %c0_27, %c0_28], %40 {strides = array<i32>} : memref<1x1x1xf32, #tpu.memory_space<vmem>>, vector<1x1x1xf32>,
    } else {
    }
    return
  }
  func.func @transform_0(%arg0: i32, %arg1: i32) -> (i32, i32, i32) {
    %c0_i32 = arith.constant 0 : i32
    %c0_i32_0 = arith.constant 0 : i32
    return %arg0, %c0_i32, %arg1 : i32, i32, i32
  }
  func.func @transform_1(%arg0: i32, %arg1: i32) -> (i32, i32, i32) {
    %c0_i32 = arith.constant 0 : i32
    %c0_i32_0 = arith.constant 0 : i32
    return %arg0, %c0_i32, %arg1 : i32, i32, i32
  }
  func.func @transform_2(%arg0: i32, %arg1: i32) -> (i32, i32, i32) {
    %c0_i32 = arith.constant 0 : i32
    %c0_i32_0 = arith.constant 0 : i32
    %c0_i32_1 = arith.constant 0 : i32
    %c0_i32_2 = arith.constant 0 : i32
    return %c0_i32, %c0_i32_0, %c0_i32_1 : i32, i32, i32
  }
  func.func @transform_3(%arg0: i32, %arg1: i32) -> (i32, i32, i32) {
    %c0_i32 = arith.constant 0 : i32
    %c0_i32_0 = arith.constant 0 : i32
    %c0_i32_1 = arith.constant 0 : i32
    return %arg0, %c0_i32, %c0_i32_0 : i32, i32, i32
  }
}

</mosaic_0001>

<llo_original>
// kernel: tpu_custom_call.1
$region0: #{tpu_custom_call.1}
  #allocation0 [shape = 'u32[]', space=smem, size = 0x4, offset = 0x4, fixed_abs, tag = 'smem constant byte address 0x4 - core index']
  #allocation1 [shape = 'u32[72,128]{1,0:T(1,128)}', space=vmem, size = 0x9000, scoped, tag = 'internal scratch']
  #allocation2 [shape = 'f32[1,256]{1,0:T(1,128)}', space=vmem, size = 0x400, scoped, tag = 'scratch operand']
  %s0 = inlined_call_operand.hbm [shape: f32[2,4,256], index: 0, kind: input, shape index: {}]
  %s1 = inlined_call_operand.vmem [shape: s32[2,1,256], index: 1, kind: input, shape index: {}]
  %s2 = inlined_call_operand.vmem [shape: f32[1,4,1], index: 2, kind: input, shape index: {}]
  %s3 = inlined_call_operand.vmem [shape: f32[2,1,1], index: 3, kind: output, shape index: {}]
  %s4 = sld [smem:[#allocation0]]
  $region57: #{tpu_custom_call.1} parent=0
    _
  %s6 = ssub.s32 1, %s4
  %s7 = scalar_select 0, %s6, %s4
  $region1: #{tpu_custom_call.1} parent=0
    #allocation3 [shape = 'u8[8192]{0}', space=vmem, size = 0x2000, scoped, tag = 'input window, operand 0']
    #allocation4 [shape = 's32[2]{0}', space=sflag, size = 0x8, scoped, tag = 'scoped memory for tpu_custom_call.1']
    %8 = vsyncpa [#allocation4], 0
    %s9 = scalar_lea.sflag [#allocation4], 1
    %10 = vsyncpa %s9, 0
    loop: start=0, step=1, limit=4
    $region2: #{tpu_custom_call.1} parent=1 // loop_pre_header
      _
    $region3: #{tpu_custom_call.1} parent=1 // loop_header
      %s12 = sphi 0, %s16
      %p13 = scmp.ge.s32.totalorder %s12, 4
      %s19 = sphi 0, %s31
      %s20 = sphi 0, %s27
      %s21 = sphi 0, %s19
      %s22 = sphi 0, %s20
      %s23 = sphi 0, %s21
      %s24 = sphi 0, %s22
      %s36 = sphi 0, %s38
      %s39 = sphi 0, %s36
      %s40 = sphi 0, %s39
      %s56 = sphi 0, %s40
      %s64 = sphi 0, %s66
      %s67 = sphi 0, %s64
      %s68 = sphi 0, %s67
      %s84 = sphi 0, %s68
      %s88 = sphi 0, %s88
      %s90 = sphi 0, %s88
      %s91 = sphi 0, %s90
      %s105 = sphi 0, %s91
      %s111 = sphi 0, %s113
      %s114 = sphi 0, %s111
      %s115 = sphi 0, %s114
      %s131 = sphi 0, %s115
    $region4: #{tpu_custom_call.1} parent=1 // loop_header_branch
      %15 = sbr.rel (%p13) target = $region8
    $region5: #{tpu_custom_call.1} parent=1 // loop_body
      %s17 = ssub.s32 %s12, 1
      %s18 = ssub.s32 %s12, 2
      %s25 = sadd.s32 1, %s20
      %p26 = scmp.ge.s32.totalorder %s25, 1
      %s27 = scalar_select %p26, 0, %s25
      %s28 = sadd.s32 1, %s19
      %s29 = scalar_select %p26, %s28, %s19
      %p30 = scmp.ge.s32.totalorder %s29, 2
      %s31 = scalar_select %p30, 0, %s29
      %s32 = ssub.s32 %s19, %s31
      %s33 = ssub.s32 %s20, %s27
      %s34 = sor.u32 %s32, %s33
      %p35 = scmp.eq.s32.totalorder %s34, 0
      %s37 = sadd.s32 %s36, 1
      %s38 = scalar_select %p35, %s36, %s37
      %p41 = pneg %p35
      %p42 = scmp.eq.s32.totalorder %s12, 1
      %p43 = por %p41, %p42
      %p44 = scmp.ne.s32.totalorder %s36, %s39
      %p45 = scmp.eq.s32.totalorder %s12, 0
      %p46 = por %p44, %p45
      %p47 = scmp.ne.s32.totalorder %s36, %s39
      %p48 = scmp.eq.s32.totalorder %s17, 1
      %p49 = por %p47, %p48
      %p50 = scmp.ne.s32.totalorder %s39, %s40
      %p51 = scmp.eq.s32.totalorder %s17, 0
      %p52 = por %p50, %p51
      %p53 = scmp.ne.s32.totalorder %s39, %s40
      %p54 = scmp.eq.s32.totalorder %s18, 1
      %p55 = por %p53, %p54
      %p57 = scmp.ne.s32.totalorder %s40, %s56
      %p58 = scmp.eq.s32.totalorder %s18, 0
      %p59 = por %p57, %p58
      %s60 = ssub.s32 %s19, %s31
      %s61 = ssub.s32 %s20, %s27
      %s62 = sor.u32 %s60, %s61
      %p63 = scmp.eq.s32.totalorder %s62, 0
      %s65 = sadd.s32 %s64, 1
      %s66 = scalar_select %p63, %s64, %s65
      %p69 = pneg %p63
      %p70 = scmp.eq.s32.totalorder %s12, 1
      %p71 = por %p69, %p70
      %p72 = scmp.ne.s32.totalorder %s64, %s67
      %p73 = scmp.eq.s32.totalorder %s12, 0
      %p74 = por %p72, %p73
      %p75 = scmp.ne.s32.totalorder %s64, %s67
      %p76 = scmp.eq.s32.totalorder %s17, 1
      %p77 = por %p75, %p76
      %p78 = scmp.ne.s32.totalorder %s67, %s68
      %p79 = scmp.eq.s32.totalorder %s17, 0
      %p80 = por %p78, %p79
      %p81 = scmp.ne.s32.totalorder %s67, %s68
      %p82 = scmp.eq.s32.totalorder %s18, 1
      %p83 = por %p81, %p82
      %p85 = scmp.ne.s32.totalorder %s68, %s84
      %p86 = scmp.eq.s32.totalorder %s18, 0
      %p87 = por %p85, %p86
      %s89 = sadd.s32 %s88, 1
      %p92 = scmp.eq.s32.totalorder %s12, 1
      %p93 = scmp.ne.s32.totalorder %s88, %s90
      %p94 = scmp.eq.s32.totalorder %s12, 0
      %p95 = por %p93, %p94
      %p96 = scmp.ne.s32.totalorder %s88, %s90
      %p97 = scmp.eq.s32.totalorder %s17, 1
      %p98 = por %p96, %p97
      %p99 = scmp.ne.s32.totalorder %s90, %s91
      %p100 = scmp.eq.s32.totalorder %s17, 0
      %p101 = por %p99, %p100
      %p102 = scmp.ne.s32.totalorder %s90, %s91
      %p103 = scmp.eq.s32.totalorder %s18, 1
      %p104 = por %p102, %p103
      %p106 = scmp.ne.s32.totalorder %s91, %s105
      %p107 = scmp.eq.s32.totalorder %s18, 0
      %p108 = por %p106, %p107
      %s109 = ssub.s32 %s19, %s31
      %p110 = scmp.eq.s32.totalorder %s109, 0
      %s112 = sadd.s32 %s111, 1
      %s113 = scalar_select %p110, %s111, %s112
      %p116 = pneg %p110
      %p117 = scmp.eq.s32.totalorder %s12, 1
      %p118 = por %p116, %p117
      %p119 = scmp.ne.s32.totalorder %s111, %s114
      %p120 = scmp.eq.s32.totalorder %s12, 0
      %p121 = por %p119, %p120
      %p122 = scmp.ne.s32.totalorder %s111, %s114
      %p123 = scmp.eq.s32.totalorder %s17, 1
      %p124 = por %p122, %p123
      %p125 = scmp.ne.s32.totalorder %s114, %s115
      %p126 = scmp.eq.s32.totalorder %s17, 0
      %p127 = por %p125, %p126
      %p128 = scmp.ne.s32.totalorder %s114, %s115
      %p129 = scmp.eq.s32.totalorder %s18, 1
      %p130 = por %p128, %p129
      %p132 = scmp.ne.s32.totalorder %s115, %s131
      %p133 = scmp.eq.s32.totalorder %s18, 0
      %p134 = por %p132, %p133
      %p135 = scmp.le.s32.totalorder 1, %s12
      %p136 = scmp.lt.s32.totalorder %s12, 3
      %p137 = pnand %p135, %p136
      %p138 = pneg %p137
      // Predicated region
      $region9: #{tpu_custom_call.1} parent=5 // pred_check
        _
      $region10: #{tpu_custom_call.1} parent=5 // pred_check_branch
        %140 = sbr.rel (%p137) target = $region12
      $region11: #{tpu_custom_call.1} parent=5 // pred_region
        %s141 = ssub.s32 %s12, 1
        // Predicated region
        $region13: #{tpu_custom_call.1} parent=11 // pred_check
          %p142 = pneg %p101
        $region14: #{tpu_custom_call.1} parent=11 // pred_check_branch
          %144 = sbr.rel (%p142) target = $region16
        $region15: #{tpu_custom_call.1} parent=11 // pred_region
          _
        $region16: #{tpu_custom_call.1} parent=11 // pred_fallthru
          _
      $region12: #{tpu_custom_call.1} parent=5 // pred_fallthru
        _
      %p145 = scmp.lt.s32.totalorder %s12, 2
      // Predicated region
      $region17: #{tpu_custom_call.1} parent=5 // pred_check
        %p146 = pneg %p145
      $region18: #{tpu_custom_call.1} parent=5 // pred_check_branch
        %148 = sbr.rel (%p146) target = $region20
      $region19: #{tpu_custom_call.1} parent=5 // pred_region
        // Predicated region
        $region21: #{tpu_custom_call.1} parent=19 // pred_check
          %p149 = pneg %p46
        $region22: #{tpu_custom_call.1} parent=19 // pred_check_branch
          %151 = sbr.rel (%p149) target = $region24
        $region23: #{tpu_custom_call.1} parent=19 // pred_region
          %s152 = sand.u32 %s36, 1
          %s153 = scalar_lea.sflag [#allocation4], %s152
          %s154 = sand.u32 %s36, 1
          %s155 = smul.addr %s154, 8
          %s156 = scalar_lea.vmem [#allocation3], %s155
          %s157 = smul.u32 2, %s20
          %159 = vsyncadd %s153, 0
          %s160 = smul.addr %s19, 2
          %s161 = sadd.s32 %s157, %s160
          %s162 = smul.addr %s161, 4
          %s163 = scalar_lea.hbm %s0, %s162
          %s165 = sshll.u32 %s163, 4
          %s166 = int_to_ptr.hbm [resolvable:$true] %s165
          %s167 = sshll.u32 %s156, 4
          %s168 = int_to_ptr.vmem [resolvable:$true] %s167
          %170 = dma.hbm_to_vmem [thread:$0]  %s166, 128, %s168, %s153
        $region24: #{tpu_custom_call.1} parent=19 // pred_fallthru
          _
        // Predicated region
        $region25: #{tpu_custom_call.1} parent=19 // pred_check
          %p171 = pneg %p74
        $region26: #{tpu_custom_call.1} parent=19 // pred_check_branch
          %173 = sbr.rel (%p171) target = $region28
        $region27: #{tpu_custom_call.1} parent=19 // pred_region
          %s174 = smul.u32 2, %s20
          %p175 = scmp.lt.s32.totalorder %s19, 1
          %s176 = scalar_select %p175, %s19, 1
          %p177 = scmp.lt.s32.totalorder %s174, 1
          %s178 = scalar_select %p177, %s174, 1
          %s179 = smul.addr %s176, 2
          %s180 = sadd.s32 %s178, %s179
          %s181 = scalar_lea.vmem %s1, %s180
          %s182 = smul.u32 2, %s20
        $region28: #{tpu_custom_call.1} parent=19 // pred_fallthru
          _
      $region20: #{tpu_custom_call.1} parent=5 // pred_fallthru
        _
      %p183 = scmp.le.s32.totalorder 1, %s12
      %p184 = scmp.lt.s32.totalorder %s12, 3
      %p185 = pnand %p183, %p184
      %p186 = pneg %p185
      // Predicated region
      $region29: #{tpu_custom_call.1} parent=5 // pred_check
        _
      $region30: #{tpu_custom_call.1} parent=5 // pred_check_branch
        %188 = sbr.rel (%p185) target = $region32
      $region31: #{tpu_custom_call.1} parent=5 // pred_region
        %s189 = ssub.s32 %s12, 1
        %s190 = sand.u32 %s39, 1
        %s191 = scalar_lea.sflag [#allocation4], %s190
        %s192 = sand.u32 %s39, 1
        %s193 = smul.addr %s192, 8
        %s194 = scalar_lea.vmem [#allocation3], %s193
        // Predicated region
        $region33: #{tpu_custom_call.1} parent=31 // pred_check
          %p195 = pneg %p52
        $region34: #{tpu_custom_call.1} parent=31 // pred_check_branch
          %197 = sbr.rel (%p195) target = $region36
        $region35: #{tpu_custom_call.1} parent=31 // pred_region
          %199 = dma.done %s191, 128
        $region36: #{tpu_custom_call.1} parent=31 // pred_fallthru
          _
        %s200 = sand.u32 %s39, 1
        %s201 = scalar_lea.sflag [#allocation4], %s200
        %s202 = sand.u32 %s39, 1
        %s203 = smul.addr %s202, 8
        %s204 = scalar_lea.vmem [#allocation3], %s203
        %p205 = pneg %p52
        %p206 = pneg %p49
        %s207 = smul.u32 2, %s22
        %p208 = scmp.lt.s32.totalorder %s21, 1
        %s209 = scalar_select %p208, %s21, 1
        %p210 = scmp.lt.s32.totalorder %s207, 1
        %s211 = scalar_select %p210, %s207, 1
        %s212 = smul.addr %s209, 2
        %s213 = sadd.s32 %s211, %s212
        %s214 = scalar_lea.vmem %s1, %s213
        %p215 = pneg %p80
        %p216 = pneg %p77
        %p217 = pneg %p101
        %p218 = pneg %p98
        %p219 = pneg %p127
        %p220 = pneg %p124
        %p221 = scmp.lt.s32.totalorder %s21, 1
        %s222 = scalar_select %p221, %s21, 1
        %s223 = scalar_lea.vmem %s3, %s222
        %s224 = smul.u32 2, %s22
        %s225 = smul.u32 2, %s22
        %p226 = scmp.lt.s32.totalorder %s21, 1
        %s227 = scalar_select %p226, %s21, 1
        %p228 = scmp.lt.s32.totalorder %s225, 1
        %s229 = scalar_select %p228, %s225, 1
        %s230 = smul.addr %s227, 2
        %s231 = sadd.s32 %s229, %s230
        %s232 = scalar_lea.vmem %s1, %s231
        %s233 = smul.u32 2, %s22
        %p234 = scmp.lt.s32.totalorder %s21, 1
        %s235 = scalar_select %p234, %s21, 1
        %s236 = scalar_lea.vmem %s3, %s235
        %p237 = scmp.eq.s32.totalorder %s22, 0
        // Predicated region
        $region37: #{tpu_custom_call.1} parent=31 // pred_check
          %p238 = pneg %p237
        $region38: #{tpu_custom_call.1} parent=31 // pred_check_branch
          %240 = sbr.rel (%p238) target = $region40
        $region39: #{tpu_custom_call.1} parent=31 // pred_region
          %v241 = vlaneseq
          %vm242 = vcmp.ge.s32.totalorder %v241, 0
          %vm243 = vcmp.lt.s32.totalorder %v241, 256
          %vm244 = vmand %vm242, %vm243
          %245 = vst.msk [vmem:[#allocation2] sm:$0x3] %vm244, 0.0
        $region40: #{tpu_custom_call.1} parent=31 // pred_fallthru
          _
        %v246 = vld [vmem:[%s194] sm:$0xff]
        %v247 = vld [vmem:[%s232] sm:$0x3]
        %v248 = vld [vmem:[%s2] sm:$0xf]
        %v249 = vlaneseq
        %v250 = vshrl.u32 %v249, 7
        %v251 = vperm.slane %v247, 0
        %v252 = vperm.slane %v247, 1
        %vm253 = vcmp.eq.s32.totalorder %v250, %v251
        %vm254 = vcmp.eq.s32.totalorder %v250, %v252
        %v255 = vsel %vm253, 0.99999, 3.3333333e-06
        %v256 = vsel %vm254, 0.99999, 3.3333333e-06
        %258 = vst [vmem:[#allocation1] ss:$2 sm:$0xff] %v246
        %v259 = vld.sshfl [vmem:[#allocation1] sm:$0xff pattern:$0x75316420]
        %v260 = vld.sshfl [vmem:[#allocation1 + $0x8] sm:$0xff pattern:$0x75316420]
        %v263 = vmul.f32 %v255, %v259
        %v264 = vmul.f32 %v256, %v260
        %vm265 = vcmask 1043456
        %v266 = vsel %vm265, %v263, 0.0
        %v267 = vrot.slane %v266, 4
        %v268 = vadd.f32 %v266, %v267
        %v269 = vrot.slane %v268, 2
        %v270 = vadd.f32 %v268, %v269
        %v271 = vrot.slane %v270, 1
        %v272 = vadd.f32 %v270, %v271
        %v273 = vsel %vm265, %v264, 0.0
        %v274 = vrot.slane %v273, 4
        %v275 = vadd.f32 %v273, %v274
        %v276 = vrot.slane %v275, 2
        %v277 = vadd.f32 %v275, %v276
        %v278 = vrot.slane %v277, 1
        %v279 = vadd.f32 %v277, %v278
        %v280 = vadd.f32 %v272, 1e-05
        %v281 = vadd.f32 %v279, 1e-05
        %283 = vset.pattern.permute.xlu0 0
        %284 = vperm.xlu0 %283, %v248
        %v285 = vpop.permute.xlu0 %284
        %v287 = vsel %vm253, %v285, 0.0
        %v288 = vsel %vm254, %v285, 0.0
        %v289 = vsel %vm265, %v287, 0.0
        %v290 = vrot.slane %v289, 4
        %v291 = vadd.f32 %v289, %v290
        %v292 = vrot.slane %v291, 2
        %v293 = vadd.f32 %v291, %v292
        %v294 = vrot.slane %v293, 1
        %v295 = vadd.f32 %v293, %v294
        %v296 = vsel %vm265, %v288, 0.0
        %v297 = vrot.slane %v296, 4
        %v298 = vadd.f32 %v296, %v297
        %v299 = vrot.slane %v298, 2
        %v300 = vadd.f32 %v298, %v299
        %v301 = vrot.slane %v300, 1
        %v302 = vadd.f32 %v300, %v301
        %v303 = vlog2.pop %v280
        %v304 = vmul.f32 %v303, 0.6931472
        %v305 = vlog2.pop %v281
        %v306 = vmul.f32 %v305, 0.6931472
        %v307 = vsub.f32 1.0, %v280
        %v308 = vsub.f32 1.0, %v281
        %v309 = vmul.f32 %v307, %v307
        %v310 = vmul.f32 %v308, %v308
        %v311 = vld [vmem:[#allocation2] sm:$0x3]
        %v312 = vsub.f32 0.0, %v295
        %v313 = vsub.f32 0.0, %v302
        %v314 = vmul.f32 %v312, %v309
        %v315 = vmul.f32 %v313, %v310
        %v316 = vmul.f32 %v314, %v304
        %v317 = vmul.f32 %v315, %v306
        %v320 = vrot.slane %v317, 7
        %vm321 = vcmask 1040384
        %v322 = vsel %vm321, %v316, %v320
        %v324 = vadd.f32 %v311, %v322
        %v325 = vlaneseq
        %vm326 = vcmp.ge.s32.totalorder %v325, 0
        %vm327 = vcmp.lt.s32.totalorder %v325, 256
        %vm328 = vmand %vm326, %vm327
        %329 = vst.msk [vmem:[#allocation2] sm:$0x3] %vm328, %v324
        // Predicated region
        $region41: #{tpu_custom_call.1} parent=31 // pred_check
          %p330 = pneg %p237
        $region42: #{tpu_custom_call.1} parent=31 // pred_check_branch
          %332 = sbr.rel (%p330) target = $region44
        $region43: #{tpu_custom_call.1} parent=31 // pred_region
          %v333 = vld [vmem:[#allocation2] sm:$0x3]
          %v335 = vperm.slane %v333, 0
          %v336 = vperm.slane %v333, 1
          %v339 = vsel %vm321, %v335, 0.0
          %v340 = vsel %vm321, %v336, 0.0
          %v341 = vadd.f32 %v339, %v340
          %342 = vadd.xlane.f32.xlu0 %v341
          %v343 = vpop.xlane.xlu0 %342
          %vm344 = vcmask 0
          %345 = vst.msk [vmem:[%s236] sm:$0x1] %vm344, %v343
        $region44: #{tpu_custom_call.1} parent=31 // pred_fallthru
          _
        %p346 = scmp.lt.s32.totalorder %s21, 1
        %s347 = scalar_select %p346, %s21, 1
        %s348 = scalar_lea.vmem %s3, %s347
        // Predicated region
        $region45: #{tpu_custom_call.1} parent=31 // pred_check
          %p349 = pneg %p124
        $region46: #{tpu_custom_call.1} parent=31 // pred_check_branch
          %351 = sbr.rel (%p349) target = $region48
        $region47: #{tpu_custom_call.1} parent=31 // pred_region
          _
        $region48: #{tpu_custom_call.1} parent=31 // pred_fallthru
          _
      $region32: #{tpu_custom_call.1} parent=5 // pred_fallthru
        _
      %p352 = scmp.le.s32.totalorder 2, %s12
      // Predicated region
      $region49: #{tpu_custom_call.1} parent=5 // pred_check
        %p353 = pneg %p352
      $region50: #{tpu_custom_call.1} parent=5 // pred_check_branch
        %355 = sbr.rel (%p353) target = $region52
      $region51: #{tpu_custom_call.1} parent=5 // pred_region
        %s356 = ssub.s32 %s12, 2
        // Predicated region
        $region53: #{tpu_custom_call.1} parent=51 // pred_check
          %p357 = pneg %p130
        $region54: #{tpu_custom_call.1} parent=51 // pred_check_branch
          %359 = sbr.rel (%p357) target = $region56
        $region55: #{tpu_custom_call.1} parent=51 // pred_region
          %p360 = scmp.lt.s32.totalorder %s23, 1
          %s361 = scalar_select %p360, %s23, 1
          %s362 = scalar_lea.vmem %s3, %s361
        $region56: #{tpu_custom_call.1} parent=51 // pred_fallthru
          _
      $region52: #{tpu_custom_call.1} parent=5 // pred_fallthru
        _
    $region6: #{tpu_custom_call.1} parent=1 // loop_footer
      %s16 = sadd.s32 1, %s12
    $region7: #{tpu_custom_call.1} parent=1 // loop_footer_branch
      %11 = sbr.rel target = $region3
    $region8: #{tpu_custom_call.1} parent=1 // loop_exit
      _
    %363 = vsyncpa [#allocation4], 1
    %s364 = scalar_lea.sflag [#allocation4], 1
    %365 = vsyncpa %s364, 1

</llo_original>
